<compile_context>
chip_gen: v6e
topology: v6e:2x2x1
jax: 0.10.0
libtpu: 0.0.40
codegen_flags: <defaults>
</compile_context>

<pallas_src>
import jax
import jax.numpy as jnp
from jax.experimental import pallas as pl
from jax.experimental.pallas import tpu as pltpu

# One block's byte target. Steady-state VMEM is ~4x this (double-buffered input
# + output buffers) = ~16 MiB, safely under the 32 MiB scoped limit requested
# below on every generation (v5e/v6e: 128 MiB physical, v7x: 64 MiB physical).
_BLOCK_BYTE_TARGET = 4 << 20   # 4 MiB
_VMEM_LIMIT_BYTES = 32 << 20   # raises v5e's 16 MiB scoped default; <= v7x phys


def _chomp_copy_kernel(x_ref, o_ref):
    # Identical block shapes for input and output: plain dense copy.
    o_ref[...] = x_ref[...]


def _round_up(x: int, m: int) -> int:
    return ((x + m - 1) // m) * m


def _round_down(x: int, m: int) -> int:
    return (x // m) * m


def _sublane_packing(dtype) -> int:
    # f32 -> 8, bf16 -> 16, int8/fp8 -> 32 rows per packed sublane tile.
    itemsize = jnp.dtype(dtype).itemsize
    return max(8, 32 // max(1, itemsize))


def _pick_tiles(rows: int, l_out: int, dtype) -> tuple[int, int]:
    """Byte-budget tile picker: lane tile first, then grow the row tile."""
    itemsize = jnp.dtype(dtype).itemsize
    sub = _sublane_packing(dtype)
    budget_elems = _BLOCK_BYTE_TARGET // itemsize

    # Lane tile: multiple of 128, as wide as l_out allows (keeps the strided
    # source DMA's contiguous runs long), capped so >= `sub` rows still fit
    # inside the byte budget.
    tl_cap = max(128, _round_down(budget_elems // sub, 128))
    tl = min(_round_up(l_out, 128), tl_cap)

    # Row tile: multiple of the dtype's sublane packing, grown until the block
    # hits the byte budget (constant in *bytes* across f32/bf16/int8).
    tr_cap = max(sub, _round_down(budget_elems // tl, sub))
    tr = min(_round_up(rows, sub), tr_cap)

    # v7x has 2 TensorCores: if a large array collapsed to a single 1x1 grid,
    # split the (parallel) row axis so both cores get work. Harmless no-op on
    # single-TC v5e/v6e.
    if (
        pl.cdiv(rows, tr) == 1
        and pl.cdiv(l_out, tl) == 1
        and rows >= 2 * sub
        and rows * l_out * itemsize >= (1 << 20)
    ):
        tr = _round_up(pl.cdiv(rows, 2), sub)

    return tr, tl


def chomp1d(x: jax.Array, chomp_size: int) -> jax.Array:
    """Pallas equivalent of Chomp1d.forward: x[:, :, :-chomp_size]."""
    assert chomp_size > 0, "chomp_size must be positive"
    n, c, l = x.shape
    l_out = l - chomp_size
    assert l_out > 0, "chomp_size must be smaller than the time dimension"

    # Flatten batch and channel into one row axis (free for contiguous x).
    rows = n * c
    x2 = x.reshape(rows, l)

    tr, tl = _pick_tiles(rows, l_out, x.dtype)
    grid = (pl.cdiv(rows, tr), pl.cdiv(l_out, tl))

    out2 = pl.pallas_call(
        _chomp_copy_kernel,
        out_shape=jax.ShapeDtypeStruct((rows, l_out), x.dtype),
        grid_spec=pltpu.PrefetchScalarGridSpec(
            num_scalar_prefetch=0,
            grid=grid,
            # Same block shape + index_map for input and output: output column
            # k reads input column k, so only the first l_out columns are ever
            # fetched (the final edge block may over-read into the chomped
            # tail; those values are clipped on writeback).
            in_specs=[pl.BlockSpec((tr, tl), lambda i, j: (i, j))],
            out_specs=pl.BlockSpec((tr, tl), lambda i, j: (i, j)),
        ),
        compiler_params=pltpu.CompilerParams(
            dimension_semantics=("parallel", "parallel"),
            vmem_limit_bytes=_VMEM_LIMIT_BYTES,
        ),
    )(x2)

    return out2.reshape(n, c, l_out)


if __name__ == "__main__":
    key = jax.random.PRNGKey(0)

    # Primary check: shapes consistent with the TCN module.
    N, C, L = 2, 4, 16
    chomp_size = 3  # (kernel_size-1)*dilation padding removed in a TCN block
    x = jax.random.normal(key, (N, C, L), dtype=jnp.float32)

    out = chomp1d(x, chomp_size)
    out = jax.block_until_ready(out)

    ref = x[:, :, :-chomp_size]
    assert out.shape == (N, C, L - chomp_size), out.shape
    assert out.dtype == x.dtype
    assert jnp.array_equal(out, ref)

    # Secondary check: unaligned rows / length and a narrow dtype, exercising
    # the byte-budget tiler and edge-block clipping.
    k2 = jax.random.PRNGKey(1)
    x2 = jax.random.normal(k2, (3, 25, 300), dtype=jnp.bfloat16)
    out2 = jax.block_until_ready(chomp1d(x2, 2))
    assert out2.shape == (3, 25, 298), out2.shape
    assert jnp.array_equal(out2, x2[:, :, :-2])

    print("KERNEL_OK")
</pallas_src>

<mosaic_0001>
module attributes {stable_mosaic.version = 11 : i64} {
  func.func @_chomp_copy_kernel(%arg0: i32, %arg1: i32, %arg2: memref<8x128xf32, #tpu.memory_space<vmem>>, %arg3: memref<8x128xf32, #tpu.memory_space<vmem>>) attributes {dimension_semantics = [#tpu.dimension_semantics<parallel>, #tpu.dimension_semantics<parallel>], iteration_bounds = array<i64: 1, 1>, scalar_prefetch = 0 : i64, scratch_operands = 0 : i64, tpu.core_type = #tpu.core_type<tc>, window_params = [{transform_indices = @transform_0, window_bounds = array<i64: 8, 128>}, {transform_indices = @transform_1, window_bounds = array<i64: 8, 128>}]} {
    %c0 = arith.constant 0 : index
    %c0_0 = arith.constant 0 : index
    %0 = vector.load %arg2[%c0, %c0_0] : memref<8x128xf32, #tpu.memory_space<vmem>>, vector<8x128xf32>
    %c0_1 = arith.constant 0 : index
    %c0_2 = arith.constant 0 : index
    %1 = vector.load %arg3[%c0_1, %c0_2] : memref<8x128xf32, #tpu.memory_space<vmem>>, vector<8x128xf32>
    tpu.vector_store %arg3[%c0_1, %c0_2], %0 {strides = array<i32>} : memref<8x128xf32, #tpu.memory_space<vmem>>, vector<8x128xf32>,
    return
  }
  func.func @transform_0(%arg0: i32, %arg1: i32) -> (i32, i32) {
    %c0_i32 = arith.constant 0 : i32
    return %arg0, %arg1 : i32, i32
  }
  func.func @transform_1(%arg0: i32, %arg1: i32) -> (i32, i32) {
    %c0_i32 = arith.constant 0 : i32
    return %arg0, %arg1 : i32, i32
  }
}

</mosaic_0001>

<llo_original>
// kernel: tpu_custom_call.1
$region0: #{tpu_custom_call.1}
  #allocation0 [shape = 'u32[]', space=smem, size = 0x4, offset = 0x4, fixed_abs, tag = 'smem constant byte address 0x4 - core index']
  #allocation1 [shape = 'u32[144,128]{1,0:T(1,128)}', space=vmem, size = 0x12000, scoped, tag = 'internal scratch']
  %s0 = inlined_call_operand.hbm [shape: f32[8,16], index: 0, kind: input, shape index: {}]
  %s1 = inlined_call_operand.hbm [shape: f32[8,13], index: 1, kind: output, shape index: {}]
  %s2 = sld [smem:[#allocation0]]
  $region18: #{tpu_custom_call.1} parent=0
    _
  %s4 = ssub.s32 1, %s2
  %s5 = scalar_select 0, %s4, %s2
  $region1: #{tpu_custom_call.1} parent=0
    #allocation2 [shape = 'u8[4096]{0}', space=vmem, size = 0x1000, scoped, tag = 'input window, operand 0, single buffered']
    #allocation3 [shape = 's32[1]{0}', space=sflag, size = 0x4, scoped, tag = 'scoped memory for tpu_custom_call.1']
    #allocation4 [shape = 's32[1]{0}', space=sflag, size = 0x4, scoped, tag = 'scoped memory for tpu_custom_call.1']
    #allocation5 [shape = 'u8[4096]{0}', space=vmem, size = 0x1000, scoped, tag = 'output window, operand 0, single buffered']
    %6 = vsyncpa [#allocation3], 0
    %7 = vsyncpa [#allocation4], 0
    // Predicated region
    $region2: #{tpu_custom_call.1} parent=1 // pred_check
      _
    $region3: #{tpu_custom_call.1} parent=1 // pred_check_branch
      %9 = sbr.rel (0) target = $region5
    $region4: #{tpu_custom_call.1} parent=1 // pred_region
      %s11 = ssub.s32 128, 128
      %12 = vsyncadd [#allocation3], %s11
      %s14 = sshll.u32 [#allocation2], 4
      %s15 = int_to_ptr.vmem [resolvable:$true] %s14
      %17 = dma.hbm_to_vmem [thread:$0]  %s0, 128, %s15, [#allocation3]
    $region5: #{tpu_custom_call.1} parent=1 // pred_fallthru
      _
    // Predicated region
    $region6: #{tpu_custom_call.1} parent=1 // pred_check
      _
    $region7: #{tpu_custom_call.1} parent=1 // pred_check_branch
      %19 = sbr.rel (0) target = $region9
    $region8: #{tpu_custom_call.1} parent=1 // pred_region
      %20 = dma.done [#allocation3], 128
    $region9: #{tpu_custom_call.1} parent=1 // pred_fallthru
      _
    %v21 = vld [vmem:[#allocation2] sm:$0xff]
    %22 = vst [vmem:[#allocation5] sm:$0xff] %v21
    // Predicated region
    $region10: #{tpu_custom_call.1} parent=1 // pred_check
      _
    $region11: #{tpu_custom_call.1} parent=1 // pred_check_branch
      %24 = sbr.rel (0) target = $region13
    $region12: #{tpu_custom_call.1} parent=1 // pred_region
      %s26 = ssub.s32 128, 128
      %27 = vsyncadd [#allocation4], %s26
      %s29 = sshll.u32 [#allocation5], 4
      %s30 = int_to_ptr.vmem [resolvable:$true] %s29
      %32 = dma.vmem_to_hbm [thread:$0]  %s30, 128, %s1, [#allocation4]
    $region13: #{tpu_custom_call.1} parent=1 // pred_fallthru
      _
    // Predicated region
    $region14: #{tpu_custom_call.1} parent=1 // pred_check
      _
    $region15: #{tpu_custom_call.1} parent=1 // pred_check_branch
      %34 = sbr.rel (0) target = $region17
    $region16: #{tpu_custom_call.1} parent=1 // pred_region
      %35 = dma.done [#allocation4], 128
    $region17: #{tpu_custom_call.1} parent=1 // pred_fallthru
      _
    %36 = vsyncpa [#allocation3], 1
    %37 = vsyncpa [#allocation4], 1

</llo_original>
